<compile_context>
chip_gen: v7x
topology: tpu7x:2x2x1
jax: 0.10.0
libtpu: 0.0.40
codegen_flags: <defaults>
</compile_context>

<pallas_src>
import functools

import jax
import jax.numpy as jnp
from jax import lax
from jax.experimental import pallas as pl
from jax.experimental.pallas import tpu as pltpu

EPS = 1e-8
_MIB = 1024 * 1024


# ----------------------------------------------------------------------------
# Kernels
# ----------------------------------------------------------------------------
def _gln_fused_kernel(y_ref, g_ref, b_ref, o_ref):
    """Single-pass gLN for one batch element. y_ref/o_ref: (N, K); g/b: (N, 1)."""
    yf = y_ref[...].astype(jnp.float32)                      # slab resident in VMEM
    inv_cnt = 1.0 / float(yf.shape[0] * yf.shape[1])

    mean = jnp.sum(yf) * inv_cnt
    centered = yf - mean
    # Exact second sweep for the variance (mean((y - mean)^2), like the reference);
    # no extra HBM traffic since the slab is already in VMEM.
    var = jnp.sum(centered * centered) * inv_cnt
    inv_std = lax.rsqrt(var + EPS)                           # EUP, effectively free

    g2 = g_ref[...].astype(jnp.float32) * inv_std            # (N, 1)
    bf = b_ref[...].astype(jnp.float32)                      # (N, 1)
    o_ref[...] = (g2 * centered + bf).astype(o_ref.dtype)


def _gln_partial_stats_kernel(y_ref, psum_ref, psumsq_ref, *, k_len, tk, need_mask):
    """Two-pass path, pass 1: per-(batch, K-tile) partial sum / sum-of-squares.

    Fully parallel grid (no cross-tile accumulation in-kernel); the tiny cross-tile
    reduction happens in plain jnp between the two pallas_calls.
    """
    yf = y_ref[...].astype(jnp.float32)                      # (N, TK)
    if need_mask:
        # Mask out padded columns of the last (out-of-bounds) K tile.
        col = (lax.broadcasted_iota(jnp.int32, yf.shape, 1)
               + pl.program_id(1) * tk)
        yf = jnp.where(col < k_len, yf, 0.0)
    psum_ref[...] = jnp.full(psum_ref.shape, jnp.sum(yf), jnp.float32)
    psumsq_ref[...] = jnp.full(psumsq_ref.shape, jnp.sum(yf * yf), jnp.float32)


def _gln_apply_kernel(y_ref, g2_ref, b2_ref, o_ref):
    """Two-pass path, pass 2: pure load-FMA-store normalize of one (N, TK) tile."""
    yf = y_ref[...].astype(jnp.float32)                      # (N, TK)
    o_ref[...] = (g2_ref[...] * yf + b2_ref[...]).astype(o_ref.dtype)


# ----------------------------------------------------------------------------
# Budgeting helpers (generation aware)
# ----------------------------------------------------------------------------
def _vmem_capacity_bytes():
    try:
        return int(pltpu.get_tpu_info().vmem_capacity_bytes)
    except Exception:
        # Conservative fallback (assume the smallest, v7x-class 64 MiB VMEM).
        return 64 * _MIB


def _budgets():
    cap = _vmem_capacity_bytes()
    if cap <= 80 * _MIB:
        # v7x-class: 64 MiB physical VMEM per TensorCore, 2 TCs per chip.
        return dict(
            limit_cap=min(cap - 12 * _MIB, 52 * _MIB),   # never request all of VMEM
            single_pass=28 * _MIB,
            tile_budget=6 * _MIB,
            dual_tc=True,
        )
    # v5e / v6e class: 128 MiB VMEM, single TensorCore.
    return dict(
        limit_cap=104 * _MIB,
        single_pass=96 * _MIB,
        tile_budget=12 * _MIB,
        dual_tc=False,
    )


def _mosaic_params(vmem_est_bytes, dims, limit_cap):
    floor = min(32 * _MIB, limit_cap)
    limit = int(max(floor, min(limit_cap, vmem_est_bytes * 5 // 4)))
    return pltpu.CompilerParams(dimension_semantics=dims, vmem_limit_bytes=limit)


def _pick_k_tile(K, N, budget_bytes):
    """Largest lane-aligned (multiple-of-128) K tile whose f32 block fits the budget."""
    per_col = max(int(N), 1) * 4
    max_cols = (budget_bytes // per_col) // 128 * 128
    max_cols = max(max_cols, 128)
    k_pad = -(-int(K) // 128) * 128
    return int(min(max_cols, k_pad))


# ----------------------------------------------------------------------------
# Pallas wrappers
# ----------------------------------------------------------------------------
def _gln_single_pass(y, g2d, b2d, vmem_est, limit_cap):
    M, N, K = y.shape
    return pl.pallas_call(
        _gln_fused_kernel,
        out_shape=jax.ShapeDtypeStruct((M, N, K), y.dtype),
        grid_spec=pltpu.PrefetchScalarGridSpec(
            num_scalar_prefetch=0,
            grid=(M,),
            in_specs=[
                pl.BlockSpec((None, N, K), lambda m: (m, 0, 0)),
                pl.BlockSpec((N, 1), lambda m: (0, 0)),
                pl.BlockSpec((N, 1), lambda m: (0, 0)),
            ],
            out_specs=pl.BlockSpec((None, N, K), lambda m: (m, 0, 0)),
        ),
        compiler_params=_mosaic_params(vmem_est, ("parallel",), limit_cap),
    )(y, g2d, b2d)


def _gln_two_pass(y, g2d, b2d, tk, limit_cap):
    M, N, K = y.shape
    kt = pl.cdiv(K, tk)
    in_blk = N * tk * y.dtype.itemsize
    f32_blk = N * tk * 4

    # ---- Pass 1: per-tile partial sums (fully parallel grid). ----------------
    stats_kernel = functools.partial(
        _gln_partial_stats_kernel, k_len=K, tk=tk, need_mask=(K % tk != 0))
    stats_shape = jax.ShapeDtypeStruct((M, kt, 1, 1), jnp.float32)
    stats_est = 2 * in_blk + f32_blk + _MIB
    psum, psumsq = pl.pallas_call(
        stats_kernel,
        out_shape=(stats_shape, stats_shape),
        grid_spec=pltpu.PrefetchScalarGridSpec(
            num_scalar_prefetch=0,
            grid=(M, kt),
            in_specs=[pl.BlockSpec((None, N, tk), lambda m, k: (m, 0, k))],
            out_specs=(
                pl.BlockSpec((None, None, 1, 1), lambda m, k: (m, k, 0, 0)),
                pl.BlockSpec((None, None, 1, 1), lambda m, k: (m, k, 0, 0)),
            ),
        ),
        compiler_params=_mosaic_params(stats_est, ("parallel", "parallel"), limit_cap),
    )(y)

    # ---- Tiny (M, N) interlude in plain jnp: fold gamma/inv_std/mean/beta. ---
    count = float(N * K)
    sums = jnp.sum(psum[:, :, 0, 0], axis=1)                  # (M,)
    sumsqs = jnp.sum(psumsq[:, :, 0, 0], axis=1)              # (M,)
    mean = sums / count
    var = jnp.maximum(sumsqs / count - mean * mean, 0.0)      # guard cancellation
    inv_std = lax.rsqrt(var + EPS)
    gf = g2d.reshape(1, N).astype(jnp.float32)
    bf = b2d.reshape(1, N).astype(jnp.float32)
    g2 = gf * inv_std[:, None]                                # (M, N)
    b2 = bf - g2 * mean[:, None]                              # (M, N)
    g2 = g2[..., None]                                        # (M, N, 1)
    b2 = b2[..., None]

    # ---- Pass 2: normalize each (N, TK) tile (fully parallel grid). ----------
    norm_est = 4 * in_blk + 2 * f32_blk + _MIB
    return pl.pallas_call(
        _gln_apply_kernel,
        out_shape=jax.ShapeDtypeStruct((M, N, K), y.dtype),
        grid_spec=pltpu.PrefetchScalarGridSpec(
            num_scalar_prefetch=0,
            grid=(M, kt),
            in_specs=[
                pl.BlockSpec((None, N, tk), lambda m, k: (m, 0, k)),
                pl.BlockSpec((None, N, 1), lambda m, k: (m, 0, 0)),
                pl.BlockSpec((None, N, 1), lambda m, k: (m, 0, 0)),
            ],
            out_specs=pl.BlockSpec((None, N, tk), lambda m, k: (m, 0, k)),
        ),
        compiler_params=_mosaic_params(norm_est, ("parallel", "parallel"), limit_cap),
    )(y, g2, b2)


def global_layer_norm(y, gamma, beta, *, max_single_pass_bytes=None, k_tile=None):
    """gLN(y). y: [M, N, K]; gamma/beta: [1, N, 1] (PyTorch parameter layout)."""
    M, N, K = y.shape
    cfg = _budgets()

    thresh = max_single_pass_bytes
    if thresh is None:
        thresh = cfg["single_pass"]
        if cfg["dual_tc"] and M < 2:
            # v7x has 2 TensorCores; a batch-only grid with M=1 leaves one idle.
            # Prefer the K-tiled (fully parallel) path for non-tiny slabs.
            thresh = min(thresh, 8 * _MIB)

    in_b = N * K * y.dtype.itemsize
    f32_b = N * K * 4
    # Double-buffered in + out blocks plus f32 working copies / centered temp.
    single_est = 4 * in_b + 3 * f32_b + 2 * _MIB

    if k_tile is not None:
        tk = max(128, -(-int(k_tile) // 128) * 128)
        tk = min(tk, -(-int(K) // 128) * 128)
    else:
        tk = _pick_k_tile(K, N, cfg["tile_budget"])
    kt = pl.cdiv(K, tk)

    g2d = jnp.reshape(gamma, (N, 1))
    b2d = jnp.reshape(beta, (N, 1))

    if single_est <= thresh or kt < 2:
        return _gln_single_pass(y, g2d, b2d, single_est, cfg["limit_cap"])
    return _gln_two_pass(y, g2d, b2d, tk, cfg["limit_cap"])


def global_layer_norm_ref(y, gamma, beta):
    mean = jnp.mean(jnp.mean(y, axis=1, keepdims=True), axis=2, keepdims=True)
    var = jnp.mean(
        jnp.mean((y - mean) ** 2, axis=1, keepdims=True), axis=2, keepdims=True
    )
    return gamma * (y - mean) / jnp.sqrt(var + EPS) + beta


if __name__ == "__main__":
    key = jax.random.PRNGKey(0)
    k1, k2, k3, k4, k5 = jax.random.split(key, 5)

    # Test 1: small shapes, fused single-pass kernel; params as reset_parameters()
    # (gamma = 1, beta = 0).
    M, N, K = 2, 4, 16
    y = jax.random.normal(k1, (M, N, K), dtype=jnp.float32)
    gamma = jnp.ones((1, N, 1), dtype=jnp.float32)
    beta = jnp.zeros((1, N, 1), dtype=jnp.float32)
    out = jax.block_until_ready(global_layer_norm(y, gamma, beta))
    ref = global_layer_norm_ref(y, gamma, beta)
    assert out.shape == (M, N, K)
    assert jnp.allclose(out, ref, atol=1e-5, rtol=1e-5), "single-pass mismatch"

    # Test 2: forced K-tiled two-pass path with NON-divisible K (cdiv grid +
    # masked last tile) and non-trivial gamma/beta; K=320, TK=128 -> 3 tiles.
    M2, N2, K2 = 2, 8, 320
    y2 = jax.random.normal(k2, (M2, N2, K2), dtype=jnp.float32) * 2.0 + 0.5
    gamma2 = jax.random.normal(k3, (1, N2, 1), dtype=jnp.float32)
    beta2 = jax.random.normal(k4, (1, N2, 1), dtype=jnp.float32)
    out2 = jax.block_until_ready(
        global_layer_norm(y2, gamma2, beta2, max_single_pass_bytes=0, k_tile=128)
    )
    ref2 = global_layer_norm_ref(y2, gamma2, beta2)
    assert out2.shape == (M2, N2, K2)
    assert jnp.allclose(out2, ref2, atol=1e-4, rtol=1e-4), "two-pass mismatch"

    # Test 3: default routing (exercises generation-aware budget selection), M=1.
    M3, N3, K3 = 1, 8, 256
    y3 = jax.random.normal(k5, (M3, N3, K3), dtype=jnp.float32)
    gamma3 = jnp.ones((1, N3, 1), dtype=jnp.float32)
    beta3 = jnp.zeros((1, N3, 1), dtype=jnp.float32)
    out3 = jax.block_until_ready(global_layer_norm(y3, gamma3, beta3))
    ref3 = global_layer_norm_ref(y3, gamma3, beta3)
    assert jnp.allclose(out3, ref3, atol=1e-5, rtol=1e-5), "default-path mismatch"

    print("KERNEL_OK")
</pallas_src>

<mosaic_0001>
module attributes {stable_mosaic.version = 11 : i64} {
  func.func @_gln_fused_kernel(%arg0: i32, %arg1: memref<1x4x16xf32, #tpu.memory_space<vmem>>, %arg2: memref<4x1xf32, #tpu.memory_space<vmem>>, %arg3: memref<4x1xf32, #tpu.memory_space<vmem>>, %arg4: memref<1x4x16xf32, #tpu.memory_space<vmem>>) attributes {dimension_semantics = [#tpu.dimension_semantics<parallel>], iteration_bounds = array<i64: 2>, scalar_prefetch = 0 : i64, scratch_operands = 0 : i64, tpu.core_type = #tpu.core_type<tc>, window_params = [{transform_indices = @transform_0, window_bounds = array<i64: 1, 4, 16>}, {pipeline_mode = #tpu.pipeline_mode<synchronous>, transform_indices = @transform_1, window_bounds = array<i64: 4, 1>}, {pipeline_mode = #tpu.pipeline_mode<synchronous>, transform_indices = @transform_2, window_bounds = array<i64: 4, 1>}, {transform_indices = @transform_3, window_bounds = array<i64: 1, 4, 16>}]} {
    %c0 = arith.constant 0 : index
    %c0_0 = arith.constant 0 : index
    %c0_1 = arith.constant 0 : index
    %0 = vector.load %arg1[%c0, %c0_0, %c0_1] : memref<1x4x16xf32, #tpu.memory_space<vmem>>, vector<1x4x16xf32>
    %1 = vector.shape_cast %0 : vector<1x4x16xf32> to vector<4x16xf32>
    %2 = vector.shape_cast %1 : vector<4x16xf32> to vector<1x4x16xf32>
    %cst = arith.constant dense<0.000000e+00> : vector<1xf32>
    %3 = vector.multi_reduction <add>, %2, %cst [1, 2] : vector<1x4x16xf32> to vector<1xf32>
    %4 = vector.shape_cast %3 : vector<1xf32> to vector<1x1x1xf32>
    %5 = vector.extract %4[0, 0, 0] : f32 from vector<1x1x1xf32>
    %cst_2 = arith.constant 1.562500e-02 : f32
    %6 = arith.mulf %5, %cst_2 : f32
    %7 = vector.broadcast %6 : f32 to vector<4x16xf32>
    %8 = arith.subf %1, %7 : vector<4x16xf32>
    %9 = arith.mulf %8, %8 : vector<4x16xf32>
    %10 = vector.shape_cast %9 : vector<4x16xf32> to vector<1x4x16xf32>
    %cst_3 = arith.constant dense<0.000000e+00> : vector<1xf32>
    %11 = vector.multi_reduction <add>, %10, %cst_3 [1, 2] : vector<1x4x16xf32> to vector<1xf32>
    %12 = vector.shape_cast %11 : vector<1xf32> to vector<1x1x1xf32>
    %13 = vector.extract %12[0, 0, 0] : f32 from vector<1x1x1xf32>
    %cst_4 = arith.constant 1.562500e-02 : f32
    %14 = arith.mulf %13, %cst_4 : f32
    %cst_5 = arith.constant 9.99999993E-9 : f32
    %15 = arith.addf %14, %cst_5 : f32
    %16 = math.rsqrt %15 : f32
    %c0_6 = arith.constant 0 : index
    %c0_7 = arith.constant 0 : index
    %17 = vector.load %arg2[%c0_6, %c0_7] : memref<4x1xf32, #tpu.memory_space<vmem>>, vector<4x1xf32>
    %18 = vector.broadcast %16 : f32 to vector<4x1xf32>
    %19 = arith.mulf %17, %18 : vector<4x1xf32>
    %c0_8 = arith.constant 0 : index
    %c0_9 = arith.constant 0 : index
    %20 = vector.load %arg3[%c0_8, %c0_9] : memref<4x1xf32, #tpu.memory_space<vmem>>, vector<4x1xf32>
    %21 = vector.broadcast %19 : vector<4x1xf32> to vector<4x16xf32>
    %22 = arith.mulf %21, %8 : vector<4x16xf32>
    %23 = vector.broadcast %20 : vector<4x1xf32> to vector<4x16xf32>
    %24 = arith.addf %22, %23 : vector<4x16xf32>
    %c0_10 = arith.constant 0 : index
    %c0_11 = arith.constant 0 : index
    %c0_12 = arith.constant 0 : index
    %25 = vector.load %arg4[%c0_10, %c0_11, %c0_12] : memref<1x4x16xf32, #tpu.memory_space<vmem>>, vector<1x4x16xf32>
    %26 = vector.shape_cast %25 : vector<1x4x16xf32> to vector<4x16xf32>
    %27 = vector.shape_cast %24 : vector<4x16xf32> to vector<1x4x16xf32>
    tpu.vector_store %arg4[%c0_10, %c0_11, %c0_12], %27 {strides = array<i32>} : memref<1x4x16xf32, #tpu.memory_space<vmem>>, vector<1x4x16xf32>,
    return
  }
  func.func @transform_0(%arg0: i32) -> (i32, i32, i32) {
    %c0_i32 = arith.constant 0 : i32
    %c0_i32_0 = arith.constant 0 : i32
    %c0_i32_1 = arith.constant 0 : i32
    return %arg0, %c0_i32, %c0_i32_0 : i32, i32, i32
  }
  func.func @transform_1(%arg0: i32) -> (i32, i32) {
    %c0_i32 = arith.constant 0 : i32
    %c0_i32_0 = arith.constant 0 : i32
    %c0_i32_1 = arith.constant 0 : i32
    return %c0_i32, %c0_i32_0 : i32, i32
  }
  func.func @transform_2(%arg0: i32) -> (i32, i32) {
    %c0_i32 = arith.constant 0 : i32
    %c0_i32_0 = arith.constant 0 : i32
    %c0_i32_1 = arith.constant 0 : i32
    return %c0_i32, %c0_i32_0 : i32, i32
  }
  func.func @transform_3(%arg0: i32) -> (i32, i32, i32) {
    %c0_i32 = arith.constant 0 : i32
    %c0_i32_0 = arith.constant 0 : i32
    %c0_i32_1 = arith.constant 0 : i32
    return %arg0, %c0_i32, %c0_i32_0 : i32, i32, i32
  }
}

</mosaic_0001>

<llo_original>
// kernel: tpu_custom_call.1
$region0: #{tpu_custom_call.1}
  #allocation0 [shape = 'u32[]', space=smem, size = 0x4, offset = 0x4, fixed_abs, tag = 'smem constant byte address 0x4 - core index']
  #allocation1 [shape = 'u32[144,128]{1,0:T(1,128)}', space=vmem, size = 0x12000, scoped, tag = 'internal scratch']
  %s0 = inlined_call_operand.vmem [shape: f32[2,4,16], index: 0, kind: input, shape index: {}]
  %s1 = inlined_call_operand.vmem [shape: f32[4,1], index: 1, kind: input, shape index: {}]
  %s2 = inlined_call_operand.vmem [shape: f32[4,1], index: 2, kind: input, shape index: {}]
  %s3 = inlined_call_operand.hbm [shape: f32[2,4,16], index: 3, kind: output, shape index: {}]
  %s4 = sld [smem:[#allocation0]]
  $region45: #{tpu_custom_call.1} parent=0
    _
  %s6 = ssub.s32 1, %s4
  %s7 = scalar_select 0, %s6, %s4
  $region1: #{tpu_custom_call.1} parent=0
    #allocation2 [shape = 'u8[4096]{0}', space=vmem, size = 0x1000, scoped, tag = 'output window, operand 0']
    #allocation3 [shape = 's32[2]{0}', space=sflag, size = 0x8, scoped, tag = 'scoped memory for tpu_custom_call.1']
    %8 = vsyncpa [#allocation3], 0
    %s9 = scalar_lea.sflag [#allocation3], 1
    %10 = vsyncpa %s9, 0
    loop: start=0, step=1, limit=4
    $region2: #{tpu_custom_call.1} parent=1 // loop_pre_header
      _
    $region3: #{tpu_custom_call.1} parent=1 // loop_header
      %s12 = sphi 0, %s16
      %p13 = scmp.ge.s32.totalorder %s12, 4
      %s22 = sphi 0, %s24
      %s25 = sphi 0, %s22
      %s26 = sphi 0, %s25
      %s42 = sphi 0, %s26
      %s46 = sphi 0, %s46
      %s48 = sphi 0, %s46
      %s49 = sphi 0, %s48
      %s63 = sphi 0, %s49
      %s67 = sphi 0, %s67
      %s69 = sphi 0, %s67
      %s70 = sphi 0, %s69
      %s84 = sphi 0, %s70
      %s90 = sphi 0, %s92
      %s93 = sphi 0, %s90
      %s94 = sphi 0, %s93
      %s110 = sphi 0, %s94
    $region4: #{tpu_custom_call.1} parent=1 // loop_header_branch
      %15 = sbr.rel (%p13) target = $region8
    $region5: #{tpu_custom_call.1} parent=1 // loop_body
      %s17 = ssub.s32 %s12, 1
      %s18 = ssub.s32 %s12, 2
      %s19 = sadd.s32 %s12, 1
      %s20 = ssub.s32 %s12, %s19
      %p21 = scmp.eq.s32.totalorder %s20, 0
      %s23 = sadd.s32 %s22, 1
      %s24 = scalar_select %p21, %s22, %s23
      %p27 = pneg %p21
      %p28 = scmp.eq.s32.totalorder %s12, 1
      %p29 = por %p27, %p28
      %p30 = scmp.ne.s32.totalorder %s22, %s25
      %p31 = scmp.eq.s32.totalorder %s12, 0
      %p32 = por %p30, %p31
      %p33 = scmp.ne.s32.totalorder %s22, %s25
      %p34 = scmp.eq.s32.totalorder %s17, 1
      %p35 = por %p33, %p34
      %p36 = scmp.ne.s32.totalorder %s25, %s26
      %p37 = scmp.eq.s32.totalorder %s17, 0
      %p38 = por %p36, %p37
      %p39 = scmp.ne.s32.totalorder %s25, %s26
      %p40 = scmp.eq.s32.totalorder %s18, 1
      %p41 = por %p39, %p40
      %p43 = scmp.ne.s32.totalorder %s26, %s42
      %p44 = scmp.eq.s32.totalorder %s18, 0
      %p45 = por %p43, %p44
      %s47 = sadd.s32 %s46, 1
      %p50 = scmp.eq.s32.totalorder %s12, 1
      %p51 = scmp.ne.s32.totalorder %s46, %s48
      %p52 = scmp.eq.s32.totalorder %s12, 0
      %p53 = por %p51, %p52
      %p54 = scmp.ne.s32.totalorder %s46, %s48
      %p55 = scmp.eq.s32.totalorder %s17, 1
      %p56 = por %p54, %p55
      %p57 = scmp.ne.s32.totalorder %s48, %s49
      %p58 = scmp.eq.s32.totalorder %s17, 0
      %p59 = por %p57, %p58
      %p60 = scmp.ne.s32.totalorder %s48, %s49
      %p61 = scmp.eq.s32.totalorder %s18, 1
      %p62 = por %p60, %p61
      %p64 = scmp.ne.s32.totalorder %s49, %s63
      %p65 = scmp.eq.s32.totalorder %s18, 0
      %p66 = por %p64, %p65
      %s68 = sadd.s32 %s67, 1
      %p71 = scmp.eq.s32.totalorder %s12, 1
      %p72 = scmp.ne.s32.totalorder %s67, %s69
      %p73 = scmp.eq.s32.totalorder %s12, 0
      %p74 = por %p72, %p73
      %p75 = scmp.ne.s32.totalorder %s67, %s69
      %p76 = scmp.eq.s32.totalorder %s17, 1
      %p77 = por %p75, %p76
      %p78 = scmp.ne.s32.totalorder %s69, %s70
      %p79 = scmp.eq.s32.totalorder %s17, 0
      %p80 = por %p78, %p79
      %p81 = scmp.ne.s32.totalorder %s69, %s70
      %p82 = scmp.eq.s32.totalorder %s18, 1
      %p83 = por %p81, %p82
      %p85 = scmp.ne.s32.totalorder %s70, %s84
      %p86 = scmp.eq.s32.totalorder %s18, 0
      %p87 = por %p85, %p86
      %s88 = ssub.s32 %s12, %s19
      %p89 = scmp.eq.s32.totalorder %s88, 0
      %s91 = sadd.s32 %s90, 1
      %s92 = scalar_select %p89, %s90, %s91
      %p95 = pneg %p89
      %p96 = scmp.eq.s32.totalorder %s12, 1
      %p97 = por %p95, %p96
      %p98 = scmp.ne.s32.totalorder %s90, %s93
      %p99 = scmp.eq.s32.totalorder %s12, 0
      %p100 = por %p98, %p99
      %p101 = scmp.ne.s32.totalorder %s90, %s93
      %p102 = scmp.eq.s32.totalorder %s17, 1
      %p103 = por %p101, %p102
      %p104 = scmp.ne.s32.totalorder %s93, %s94
      %p105 = scmp.eq.s32.totalorder %s17, 0
      %p106 = por %p104, %p105
      %p107 = scmp.ne.s32.totalorder %s93, %s94
      %p108 = scmp.eq.s32.totalorder %s18, 1
      %p109 = por %p107, %p108
      %p111 = scmp.ne.s32.totalorder %s94, %s110
      %p112 = scmp.eq.s32.totalorder %s18, 0
      %p113 = por %p111, %p112
      %p114 = scmp.le.s32.totalorder 1, %s12
      %p115 = scmp.lt.s32.totalorder %s12, 3
      %p116 = pnand %p114, %p115
      %p117 = pneg %p116
      // Predicated region
      $region9: #{tpu_custom_call.1} parent=5 // pred_check
        _
      $region10: #{tpu_custom_call.1} parent=5 // pred_check_branch
        %119 = sbr.rel (%p116) target = $region12
      $region11: #{tpu_custom_call.1} parent=5 // pred_region
        %s120 = ssub.s32 %s12, 1
        // Predicated region
        $region13: #{tpu_custom_call.1} parent=11 // pred_check
          %p121 = pneg %p59
        $region14: #{tpu_custom_call.1} parent=11 // pred_check_branch
          %123 = sbr.rel (%p121) target = $region16
        $region15: #{tpu_custom_call.1} parent=11 // pred_region
          _
        $region16: #{tpu_custom_call.1} parent=11 // pred_fallthru
          _
        // Predicated region
        $region17: #{tpu_custom_call.1} parent=11 // pred_check
          %p124 = pneg %p80
        $region18: #{tpu_custom_call.1} parent=11 // pred_check_branch
          %126 = sbr.rel (%p124) target = $region20
        $region19: #{tpu_custom_call.1} parent=11 // pred_region
          _
        $region20: #{tpu_custom_call.1} parent=11 // pred_fallthru
          _
      $region12: #{tpu_custom_call.1} parent=5 // pred_fallthru
        _
      %p127 = scmp.lt.s32.totalorder %s12, 2
      // Predicated region
      $region21: #{tpu_custom_call.1} parent=5 // pred_check
        %p128 = pneg %p127
      $region22: #{tpu_custom_call.1} parent=5 // pred_check_branch
        %130 = sbr.rel (%p128) target = $region24
      $region23: #{tpu_custom_call.1} parent=5 // pred_region
        // Predicated region
        $region25: #{tpu_custom_call.1} parent=23 // pred_check
          %p131 = pneg %p32
        $region26: #{tpu_custom_call.1} parent=23 // pred_check_branch
          %133 = sbr.rel (%p131) target = $region28
        $region27: #{tpu_custom_call.1} parent=23 // pred_region
          %p134 = scmp.lt.s32.totalorder %s12, 1
          %s135 = scalar_select %p134, %s12, 1
          %s136 = smul.addr %s135, 4
          %s137 = scalar_lea.vmem %s0, %s136
        $region28: #{tpu_custom_call.1} parent=23 // pred_fallthru
          _
      $region24: #{tpu_custom_call.1} parent=5 // pred_fallthru
        _
      %p138 = scmp.le.s32.totalorder 1, %s12
      %p139 = scmp.lt.s32.totalorder %s12, 3
      %p140 = pnand %p138, %p139
      %p141 = pneg %p140
      // Predicated region
      $region29: #{tpu_custom_call.1} parent=5 // pred_check
        _
      $region30: #{tpu_custom_call.1} parent=5 // pred_check_branch
        %143 = sbr.rel (%p140) target = $region32
      $region31: #{tpu_custom_call.1} parent=5 // pred_region
        %s144 = ssub.s32 %s12, 1
        %p145 = scmp.lt.s32.totalorder %s17, 1
        %s146 = scalar_select %p145, %s17, 1
        %s147 = smul.addr %s146, 4
        %s148 = scalar_lea.vmem %s0, %s147
        %p149 = pneg %p38
        %p150 = pneg %p35
        %p151 = pneg %p59
        %p152 = pneg %p56
        %p153 = pneg %p80
        %p154 = pneg %p77
        %p155 = pneg %p106
        %p156 = pneg %p103
        %s157 = sand.u32 %s93, 1
        %s158 = scalar_lea.sflag [#allocation3], %s157
        %s159 = sand.u32 %s93, 1
        %s160 = smul.addr %s159, 4
        %s161 = scalar_lea.vmem [#allocation2], %s160
        %p162 = scmp.lt.s32.totalorder %s17, 1
        %s163 = scalar_select %p162, %s17, 1
        %s164 = smul.addr %s163, 4
        %s165 = scalar_lea.vmem %s0, %s164
        %v166 = vld [vmem:[%s165] sm:$0xf]
        %vm167 = vcmask 125952
        %v168 = vsel %vm167, %v166, 0.0
        %169 = vadd.xlane.f32.xlu0 %v168
        %v170 = vpop.xlane.xlu0 %169
        %v171 = vrot.slane %v170, 4
        %v172 = vadd.f32 %v170, %v171
        %v173 = vrot.slane %v172, 2
        %v174 = vadd.f32 %v172, %v173
        %v175 = vrot.slane %v174, 1
        %v176 = vadd.f32 %v174, %v175
        %s177 = vtos %v176
        %s178 = smul.f32 %s177, 0.015625
        %v179 = vstv %s178
        %v180 = vsub.f32 %v166, %v179
        %v181 = vmul.f32 %v180, %v180
        %v182 = vsel %vm167, %v181, 0.0
        %183 = vadd.xlane.f32.xlu0 %v182
        %v184 = vpop.xlane.xlu0 %183
        %v185 = vrot.slane %v184, 4
        %v186 = vadd.f32 %v184, %v185
        %v187 = vrot.slane %v186, 2
        %v188 = vadd.f32 %v186, %v187
        %v189 = vrot.slane %v188, 1
        %v190 = vadd.f32 %v188, %v189
        %s191 = vtos %v190
        %s192 = smul.f32 %s191, 0.015625
        %s193 = sadd.f32 %s192, 1e-08
        %v194 = vstv %s193
        %v195 = vrsqrt.pop %v194
        %s196 = vtos %v195
        %v197 = vld [vmem:[%s1] sm:$0xf]
        %v198 = vstv %s196
        %v199 = vmul.f32 %v197, %v198
        %v200 = vld [vmem:[%s2] sm:$0xf]
        %202 = vset.pattern.permute.xlu0 0
        %203 = vperm.xlu0 %202, %v199
        %v204 = vpop.permute.xlu0 %203
        %v206 = vmul.f32 %v204, %v180
        %208 = vset.pattern.permute.xlu0 0
        %209 = vperm.xlu0 %208, %v200
        %v210 = vpop.permute.xlu0 %209
        %v212 = vadd.f32 %v206, %v210
        %213 = vst.msk [vmem:[%s161] sm:$0xf] %vm167, %v212
        %s214 = sand.u32 %s93, 1
        %s215 = scalar_lea.sflag [#allocation3], %s214
        %s216 = sand.u32 %s93, 1
        %s217 = smul.addr %s216, 4
        %s218 = scalar_lea.vmem [#allocation2], %s217
        // Predicated region
        $region33: #{tpu_custom_call.1} parent=31 // pred_check
          %p219 = pneg %p103
        $region34: #{tpu_custom_call.1} parent=31 // pred_check_branch
          %221 = sbr.rel (%p219) target = $region36
        $region35: #{tpu_custom_call.1} parent=31 // pred_region
          %s223 = ssub.s32 64, 64
          %224 = vsyncadd %s215, %s223
          %s225 = smul.addr %s17, 64
          %s226 = scalar_lea.hbm %s3, %s225
          %s228 = sshll.u32 %s218, 4
          %s229 = int_to_ptr.vmem [resolvable:$true] %s228
          %231 = dma.vmem_to_hbm [thread:$0]  %s229, 64, %s226, %s215
        $region36: #{tpu_custom_call.1} parent=31 // pred_fallthru
          _
      $region32: #{tpu_custom_call.1} parent=5 // pred_fallthru
        _
      %p232 = scmp.le.s32.totalorder 2, %s12
      // Predicated region
      $region37: #{tpu_custom_call.1} parent=5 // pred_check
        %p233 = pneg %p232
      $region38: #{tpu_custom_call.1} parent=5 // pred_check_branch
        %235 = sbr.rel (%p233) target = $region40
      $region39: #{tpu_custom_call.1} parent=5 // pred_region
        %s236 = ssub.s32 %s12, 2
        // Predicated region
        $region41: #{tpu_custom_call.1} parent=39 // pred_check
          %p237 = pneg %p109
        $region42: #{tpu_custom_call.1} parent=39 // pred_check_branch
          %239 = sbr.rel (%p237) target = $region44
        $region43: #{tpu_custom_call.1} parent=39 // pred_region
          %s240 = sand.u32 %s94, 1
          %s241 = scalar_lea.sflag [#allocation3], %s240
          %s242 = sand.u32 %s94, 1
          %s243 = smul.addr %s242, 4
          %s244 = scalar_lea.vmem [#allocation2], %s243
          %245 = dma.done %s241, 64
        $region44: #{tpu_custom_call.1} parent=39 // pred_fallthru
          _
      $region40: #{tpu_custom_call.1} parent=5 // pred_fallthru
        _
    $region6: #{tpu_custom_call.1} parent=1 // loop_footer
      %s16 = sadd.s32 1, %s12
    $region7: #{tpu_custom_call.1} parent=1 // loop_footer_branch
      %11 = sbr.rel target = $region3
    $region8: #{tpu_custom_call.1} parent=1 // loop_exit
      _
    %246 = vsyncpa [#allocation3], 1
    %s247 = scalar_lea.sflag [#allocation3], 1
    %248 = vsyncpa %s247, 1

</llo_original>
